<compile_context>
chip_gen: v5e
topology: v5e:2x2
jax: 0.10.0
libtpu: 0.0.40
codegen_flags: <defaults>
</compile_context>

<pallas_src>
import math

import jax
import jax.numpy as jnp
from jax.experimental import pallas as pl
from jax.experimental.pallas import tpu as pltpu


def _round_up(x, m):
    return ((x + m - 1) // m) * m


def _wl2norm_kernel(x_ref, w_ref, wsum_ref, cnt_ref):
    """One (TR, TC) tile: accumulate weighted sum-of-squares and non-NaN count.

    Outputs are per-row-tile (1, 128) blocks, resident across the column
    (reduction) grid axis; every lane of a block holds the same partial.
    """
    # Init the per-row-tile accumulators at the first column tile.
    @pl.when(pl.program_id(1) == 0)
    def _():
        wsum_ref[...] = jnp.zeros_like(wsum_ref)
        cnt_ref[...] = jnp.zeros_like(cnt_ref)

    xb = x_ref[...]                                     # (TR, TC)
    valid = jnp.logical_not(jnp.isnan(xb))              # non-NaN mask
    xf = xb.astype(jnp.float32)
    xsq = jnp.where(valid, xf * xf, 0.0)                # nansum semantics

    # Per-row sum of squares, then apply per-row (channel) weight, reduce.
    row_sums = jnp.sum(xsq, axis=-1, keepdims=True)     # (TR, 1)
    tile_wsum = jnp.sum(row_sums * w_ref[...])          # scalar f32

    # Non-NaN element count for this tile (TR*TC < 2**24 -> exact in f32).
    tile_cnt = jnp.sum(valid.astype(jnp.float32)).astype(jnp.int32)

    wsum_ref[...] += tile_wsum                          # broadcast into (1,128)
    cnt_ref[...] += tile_cnt


def weighted_l2_norm(x, w, eps=0.0, *, tr_max=256, tc_max=2048):
    """Pallas equivalent of Model_WeightedL2Norm.forward.

    x: (B, C, H, W) or (d0, d1, C, H, W) float array (may contain NaNs).
    w: (C,) weights.
    Returns a float32 scalar.  `eps` is unused (matches the torch module).
    """
    if x.ndim == 4:
        lead, C = x.shape[:1], x.shape[1]
    elif x.ndim == 5:
        lead, C = x.shape[:2], x.shape[2]
    else:
        # TODO(synk): torch module also "works" for other ranks via its generic
        # nansum chain; only the 4D/5D 4DVarNet cases are implemented here.
        raise NotImplementedError("weighted_l2_norm supports 4D or 5D x only")
    if w.shape != (C,):
        raise ValueError(f"w must have shape ({C},), got {w.shape}")

    H, W = x.shape[-2], x.shape[-1]
    R = math.prod(lead) * C          # rows: leading dims x channel
    N = H * W                        # cols: lane-dense spatial slab

    x2 = x.reshape(R, N)
    # Per-row weight: row index iterates channels fastest within leading dims.
    w_rows = jnp.broadcast_to(
        w.astype(jnp.float32), (math.prod(lead), C)).reshape(R, 1)

    # Tile sizes: multiples of (8, 128), capped for v7x VMEM headroom.
    TR = min(tr_max, _round_up(R, 8))
    TC = min(tc_max, _round_up(N, 128))
    R_pad = _round_up(R, TR)
    C_pad = _round_up(N, TC)

    # NaN-pad x (neutral for both sum and count); zero-pad weights.
    if (R_pad, C_pad) != (R, N):
        x2 = jnp.pad(x2, ((0, R_pad - R), (0, C_pad - N)),
                     constant_values=jnp.nan)
    if R_pad != R:
        w_rows = jnp.pad(w_rows, ((0, R_pad - R), (0, 0)))

    g0, g1 = R_pad // TR, C_pad // TC

    wsum_part, cnt_part = pl.pallas_call(
        _wl2norm_kernel,
        out_shape=(
            jax.ShapeDtypeStruct((1, 128 * g0), jnp.float32),
            jax.ShapeDtypeStruct((1, 128 * g0), jnp.int32),
        ),
        grid=(g0, g1),
        in_specs=[
            pl.BlockSpec((TR, TC), lambda i, j: (i, j)),
            pl.BlockSpec((TR, 1), lambda i, j: (i, 0)),
        ],
        out_specs=(
            pl.BlockSpec((1, 128), lambda i, j: (0, i)),
            pl.BlockSpec((1, 128), lambda i, j: (0, i)),
        ),
        compiler_params=pltpu.CompilerParams(
            dimension_semantics=("parallel", "arbitrary")),
    )(x2, w_rows)

    # Tiny final combine: each 128-lane block holds one per-row-tile partial.
    wsum = jnp.sum(wsum_part.reshape(g0, 128)[:, 0])
    cnt = jnp.sum(cnt_part.reshape(g0, 128)[:, 0]).astype(jnp.float32)
    return wsum * jnp.float32(C) / cnt


if __name__ == "__main__":
    key = jax.random.PRNGKey(0)
    kx, kn, kw = jax.random.split(key, 3)

    B, C, H, W = 2, 4, 16, 16                 # small NCHW demo shape
    x = jax.random.normal(kx, (B, C, H, W), dtype=jnp.float32)
    # Inject some NaNs to exercise the nansum / non-NaN-count path.
    nan_mask = jax.random.uniform(kn, (B, C, H, W)) < 0.1
    x = jnp.where(nan_mask, jnp.nan, x)
    w = jax.random.uniform(kw, (C,), dtype=jnp.float32) + 0.5

    out = weighted_l2_norm(x, w)
    out = jax.block_until_ready(out)

    # Pure-JAX reference matching the PyTorch module exactly.
    xsq = jnp.where(jnp.isnan(x), 0.0, x * x)
    ref = jnp.sum(xsq, axis=-1)
    ref = jnp.sum(ref, axis=-1)
    ref = jnp.sum(ref, axis=0)
    ref = jnp.sum(ref * w)
    ref = ref / (jnp.sum(jnp.logical_not(jnp.isnan(x))) / w.shape[0])

    assert out.shape == ()
    assert jnp.allclose(out, ref, rtol=1e-5, atol=1e-5), (out, ref)
    print("KERNEL_OK")
</pallas_src>

<mosaic_0001>
module attributes {stable_mosaic.version = 11 : i64} {
  func.func @_wl2norm_kernel(%arg0: i32, %arg1: i32, %arg2: memref<8x256xf32, #tpu.memory_space<vmem>>, %arg3: memref<8x1xf32, #tpu.memory_space<vmem>>, %arg4: memref<1x128xf32, #tpu.memory_space<vmem>>, %arg5: memref<1x128xi32, #tpu.memory_space<vmem>>) attributes {dimension_semantics = [#tpu.dimension_semantics<parallel>, #tpu.dimension_semantics<arbitrary>], iteration_bounds = array<i64: 1, 1>, scalar_prefetch = 0 : i64, scratch_operands = 0 : i64, tpu.core_type = #tpu.core_type<tc>, window_params = [{transform_indices = @transform_0, window_bounds = array<i64: 8, 256>}, {transform_indices = @transform_1, window_bounds = array<i64: 8, 1>}, {transform_indices = @transform_2, window_bounds = array<i64: 1, 128>}, {transform_indices = @transform_3, window_bounds = array<i64: 1, 128>}]} {
    %c0_i32 = arith.constant 0 : i32
    %0 = arith.cmpi eq, %arg1, %c0_i32 : i32
    %1 = arith.extui %0 : i1 to i32
    %c0_i32_0 = arith.constant 0 : i32
    %2 = arith.cmpi ne, %1, %c0_i32_0 : i32
    scf.if %2 {
      %cst_16 = arith.constant 0.000000e+00 : f32
      %32 = vector.broadcast %cst_16 : f32 to vector<1x128xf32>
      %c0_17 = arith.constant 0 : index
      %c0_18 = arith.constant 0 : index
      %33 = vector.load %arg4[%c0_17, %c0_18] : memref<1x128xf32, #tpu.memory_space<vmem>>, vector<1x128xf32>
      tpu.vector_store %arg4[%c0_17, %c0_18], %32 {strides = array<i32>} : memref<1x128xf32, #tpu.memory_space<vmem>>, vector<1x128xf32>,
      %c0_i32_19 = arith.constant 0 : i32
      %34 = vector.broadcast %c0_i32_19 : i32 to vector<1x128xi32>
      %c0_20 = arith.constant 0 : index
      %c0_21 = arith.constant 0 : index
      %35 = vector.load %arg5[%c0_20, %c0_21] : memref<1x128xi32, #tpu.memory_space<vmem>>, vector<1x128xi32>
      tpu.vector_store %arg5[%c0_20, %c0_21], %34 {strides = array<i32>} : memref<1x128xi32, #tpu.memory_space<vmem>>, vector<1x128xi32>,
    } else {
    }
    %c0 = arith.constant 0 : index
    %c0_1 = arith.constant 0 : index
    %3 = vector.load %arg2[%c0, %c0_1] : memref<8x256xf32, #tpu.memory_space<vmem>>, vector<8x256xf32>
    %4 = arith.cmpf one, %3, %3 : vector<8x256xf32>
    %cst = arith.constant dense<true> : vector<8x256xi1>
    %5 = arith.xori %4, %cst : vector<8x256xi1>
    %6 = arith.mulf %3, %3 : vector<8x256xf32>
    %cst_2 = arith.constant 0.000000e+00 : f32
    %7 = vector.broadcast %cst_2 : f32 to vector<8x256xf32>
    %8 = arith.select %5, %6, %7 : vector<8x256xi1>, vector<8x256xf32>
    %cst_3 = arith.constant dense<0.000000e+00> : vector<8xf32>
    %9 = vector.multi_reduction <add>, %8, %cst_3 [1] : vector<8x256xf32> to vector<8xf32>
    %10 = vector.shape_cast %9 : vector<8xf32> to vector<8x1xf32>
    %c0_4 = arith.constant 0 : index
    %c0_5 = arith.constant 0 : index
    %11 = vector.load %arg3[%c0_4, %c0_5] : memref<8x1xf32, #tpu.memory_space<vmem>>, vector<8x1xf32>
    %12 = arith.mulf %10, %11 : vector<8x1xf32>
    %13 = vector.shape_cast %12 : vector<8x1xf32> to vector<1x8x1xf32>
    %cst_6 = arith.constant dense<0.000000e+00> : vector<1xf32>
    %14 = vector.multi_reduction <add>, %13, %cst_6 [1, 2] : vector<1x8x1xf32> to vector<1xf32>
    %15 = vector.shape_cast %14 : vector<1xf32> to vector<1x1x1xf32>
    %16 = vector.extract %15[0, 0, 0] : f32 from vector<1x1x1xf32>
    %17 = arith.extui %5 : vector<8x256xi1> to vector<8x256xi32>
    %18 = arith.sitofp %17 : vector<8x256xi32> to vector<8x256xf32>
    %19 = vector.shape_cast %18 : vector<8x256xf32> to vector<1x8x256xf32>
    %cst_7 = arith.constant dense<0.000000e+00> : vector<1xf32>
    %20 = vector.multi_reduction <add>, %19, %cst_7 [1, 2] : vector<1x8x256xf32> to vector<1xf32>
    %21 = vector.shape_cast %20 : vector<1xf32> to vector<1x1x1xf32>
    %22 = vector.extract %21[0, 0, 0] : f32 from vector<1x1x1xf32>
    %23 = arith.fptosi %22 : f32 to i32
    %c0_8 = arith.constant 0 : index
    %c0_9 = arith.constant 0 : index
    %24 = vector.load %arg4[%c0_8, %c0_9] : memref<1x128xf32, #tpu.memory_space<vmem>>, vector<1x128xf32>
    %25 = vector.broadcast %16 : f32 to vector<1x128xf32>
    %26 = arith.addf %24, %25 : vector<1x128xf32>
    %c0_10 = arith.constant 0 : index
    %c0_11 = arith.constant 0 : index
    %27 = vector.load %arg4[%c0_10, %c0_11] : memref<1x128xf32, #tpu.memory_space<vmem>>, vector<1x128xf32>
    tpu.vector_store %arg4[%c0_10, %c0_11], %26 {strides = array<i32>} : memref<1x128xf32, #tpu.memory_space<vmem>>, vector<1x128xf32>,
    %c0_12 = arith.constant 0 : index
    %c0_13 = arith.constant 0 : index
    %28 = vector.load %arg5[%c0_12, %c0_13] : memref<1x128xi32, #tpu.memory_space<vmem>>, vector<1x128xi32>
    %29 = vector.broadcast %23 : i32 to vector<1x128xi32>
    %30 = arith.addi %28, %29 : vector<1x128xi32>
    %c0_14 = arith.constant 0 : index
    %c0_15 = arith.constant 0 : index
    %31 = vector.load %arg5[%c0_14, %c0_15] : memref<1x128xi32, #tpu.memory_space<vmem>>, vector<1x128xi32>
    tpu.vector_store %arg5[%c0_14, %c0_15], %30 {strides = array<i32>} : memref<1x128xi32, #tpu.memory_space<vmem>>, vector<1x128xi32>,
    return
  }
  func.func @transform_0(%arg0: i32, %arg1: i32) -> (i32, i32) {
    %c0_i32 = arith.constant 0 : i32
    return %arg0, %arg1 : i32, i32
  }
  func.func @transform_1(%arg0: i32, %arg1: i32) -> (i32, i32) {
    %c0_i32 = arith.constant 0 : i32
    %c0_i32_0 = arith.constant 0 : i32
    return %arg0, %c0_i32 : i32, i32
  }
  func.func @transform_2(%arg0: i32, %arg1: i32) -> (i32, i32) {
    %c0_i32 = arith.constant 0 : i32
    %c0_i32_0 = arith.constant 0 : i32
    return %c0_i32, %arg0 : i32, i32
  }
  func.func @transform_3(%arg0: i32, %arg1: i32) -> (i32, i32) {
    %c0_i32 = arith.constant 0 : i32
    %c0_i32_0 = arith.constant 0 : i32
    return %c0_i32, %arg0 : i32, i32
  }
}

</mosaic_0001>

<llo_original>
// kernel: tpu_custom_call.1
$region0: #{tpu_custom_call.1}
  #allocation0 [shape = 'u32[]', space=smem, size = 0x4, offset = 0x4, fixed_abs, tag = 'smem constant byte address 0x4 - core index']
  #allocation1 [shape = 'u32[72,128]{1,0:T(1,128)}', space=vmem, size = 0x9000, scoped, tag = 'internal scratch']
  %s0 = inlined_call_operand.hbm [shape: f32[8,256], index: 0, kind: input, shape index: {}]
  %s1 = inlined_call_operand.vmem [shape: f32[8,1], index: 1, kind: input, shape index: {}]
  %s2 = inlined_call_operand.hbm [shape: f32[1,128], index: 2, kind: output, shape index: {0}]
  %s3 = inlined_call_operand.hbm [shape: s32[1,128], index: 3, kind: output, shape index: {1}]
  %4 = xla_tuple %s2, %s3
  %s5 = sld [smem:[#allocation0]]
  $region34: #{tpu_custom_call.1} parent=0
    _
  %s7 = ssub.s32 1, %s5
  %s8 = scalar_select 0, %s7, %s5
  $region1: #{tpu_custom_call.1} parent=0
    #allocation2 [shape = 'u8[8192]{0}', space=vmem, size = 0x2000, scoped, tag = 'input window, operand 0, single buffered']
    #allocation3 [shape = 's32[1]{0}', space=sflag, size = 0x4, scoped, tag = 'scoped memory for tpu_custom_call.1']
    #allocation4 [shape = 's32[1]{0}', space=sflag, size = 0x4, scoped, tag = 'scoped memory for tpu_custom_call.1']
    #allocation5 [shape = 'u8[512]{0}', space=vmem, size = 0x400, scoped, tag = 'output window, operand 0, single buffered']
    #allocation6 [shape = 'u8[512]{0}', space=vmem, size = 0x400, scoped, tag = 'output window, operand 1, single buffered']
    #allocation7 [shape = 's32[1]{0}', space=sflag, size = 0x4, scoped, tag = 'scoped memory for tpu_custom_call.1']
    %9 = vsyncpa [#allocation3], 0
    %10 = vsyncpa [#allocation4], 0
    %11 = vsyncpa [#allocation7], 0
    // Predicated region
    $region2: #{tpu_custom_call.1} parent=1 // pred_check
      _
    $region3: #{tpu_custom_call.1} parent=1 // pred_check_branch
      %13 = sbr.rel (0) target = $region5
    $region4: #{tpu_custom_call.1} parent=1 // pred_region
      %15 = vsyncadd [#allocation3], 0
      %s17 = sshll.u32 %s0, 4
      %s18 = int_to_ptr.hbm [resolvable:$true] %s17
      %s19 = sshll.u32 [#allocation2], 4
      %s20 = int_to_ptr.vmem [resolvable:$true] %s19
      %22 = dma.hbm_to_vmem [thread:$0]  %s18, 256, %s20, [#allocation3]
    $region5: #{tpu_custom_call.1} parent=1 // pred_fallthru
      _
    // Predicated region
    $region6: #{tpu_custom_call.1} parent=1 // pred_check
      _
    $region7: #{tpu_custom_call.1} parent=1 // pred_check_branch
      %24 = sbr.rel (0) target = $region9
    $region8: #{tpu_custom_call.1} parent=1 // pred_region
      _
    $region9: #{tpu_custom_call.1} parent=1 // pred_fallthru
      _
    // Predicated region
    $region10: #{tpu_custom_call.1} parent=1 // pred_check
      _
    $region11: #{tpu_custom_call.1} parent=1 // pred_check_branch
      %26 = sbr.rel (0) target = $region13
    $region12: #{tpu_custom_call.1} parent=1 // pred_region
      %28 = dma.done [#allocation3], 256
    $region13: #{tpu_custom_call.1} parent=1 // pred_fallthru
      _
    %p29 = scmp.eq.s32.totalorder 0, 0
    // Predicated region
    $region14: #{tpu_custom_call.1} parent=1 // pred_check
      %p30 = pneg %p29
    $region15: #{tpu_custom_call.1} parent=1 // pred_check_branch
      %32 = sbr.rel (%p30) target = $region17
    $region16: #{tpu_custom_call.1} parent=1 // pred_region
      %33 = vst [vmem:[#allocation5] sm:$0x1] 0.0
      %34 = vst [vmem:[#allocation6] sm:$0x1] 0
    $region17: #{tpu_custom_call.1} parent=1 // pred_fallthru
      _
    %v35 = vld [vmem:[#allocation2] sm:$0xff]
    %v36 = vld [vmem:[#allocation2 + $0x8] sm:$0xff]
    %vm37 = vcmp.ne.f32.partialorder %v35, %v35
    %vm38 = vcmp.ne.f32.partialorder %v36, %v36
    %vm39 = vmxor %vm37, 1
    %vm40 = vmxor %vm38, 1
    %v41 = vmul.f32 %v35, %v35
    %v42 = vmul.f32 %v36, %v36
    %v43 = vsel %vm39, %v41, 0.0
    %v44 = vsel %vm40, %v42, 0.0
    %v45 = vadd.f32 %v43, %v44
    %46 = vadd.xlane.f32.xlu0 %v45
    %v47 = vpop.xlane.xlu0 %46
    %v48 = vld [vmem:[%s1] sm:$0xff]
    %v49 = vmul.f32 %v47, %v48
    %vm50 = vcmask 7168
    %v51 = vsel %vm50, %v49, 0.0
    %52 = vadd.xlane.f32.xlu0 %v51
    %v53 = vpop.xlane.xlu0 %52
    %v54 = vrot.slane %v53, 4
    %v55 = vadd.f32 %v53, %v54
    %v56 = vrot.slane %v55, 2
    %v57 = vadd.f32 %v55, %v56
    %v58 = vrot.slane %v57, 1
    %v59 = vadd.f32 %v57, %v58
    %s60 = vtos %v59
    %v61 = vsel %vm39, 1, 0
    %v62 = vsel %vm40, 1, 0
    %v63 = vcvt.s32.f32 %v61
    %v64 = vcvt.s32.f32 %v62
    %v65 = vadd.f32 %v63, %v64
    %66 = vadd.xlane.f32.xlu0 %v65
    %v67 = vpop.xlane.xlu0 %66
    %v68 = vrot.slane %v67, 4
    %v69 = vadd.f32 %v67, %v68
    %v70 = vrot.slane %v69, 2
    %v71 = vadd.f32 %v69, %v70
    %v72 = vrot.slane %v71, 1
    %v73 = vadd.f32 %v71, %v72
    %s74 = vtos %v73
    %s75 = scvt.f32.s32.to.zero.pseudo %s74
    %v76 = vld [vmem:[#allocation5] sm:$0x1]
    %v77 = vstv %s60
    %v78 = vadd.f32 %v76, %v77
    %79 = vst [vmem:[#allocation5] sm:$0x1] %v78
    %v80 = vld [vmem:[#allocation6] sm:$0x1]
    %v81 = vstv %s75
    %v82 = vadd.s32 %v80, %v81
    %83 = vst [vmem:[#allocation6] sm:$0x1] %v82
    // Predicated region
    $region18: #{tpu_custom_call.1} parent=1 // pred_check
      _
    $region19: #{tpu_custom_call.1} parent=1 // pred_check_branch
      %85 = sbr.rel (0) target = $region21
    $region20: #{tpu_custom_call.1} parent=1 // pred_region
      %87 = vsyncadd [#allocation4], 0
      %s89 = sshll.u32 [#allocation5], 4
      %s90 = int_to_ptr.vmem [resolvable:$true] %s89
      %s91 = sshll.u32 %s2, 4
      %s92 = int_to_ptr.hbm [resolvable:$true] %s91
      %94 = dma.vmem_to_hbm [thread:$0]  %s90, 16, %s92, [#allocation4]
    $region21: #{tpu_custom_call.1} parent=1 // pred_fallthru
      _
    // Predicated region
    $region22: #{tpu_custom_call.1} parent=1 // pred_check
      _
    $region23: #{tpu_custom_call.1} parent=1 // pred_check_branch
      %96 = sbr.rel (0) target = $region25
    $region24: #{tpu_custom_call.1} parent=1 // pred_region
      %98 = vsyncadd [#allocation7], 0
      %s100 = sshll.u32 [#allocation6], 4
      %s101 = int_to_ptr.vmem [resolvable:$true] %s100
      %s102 = sshll.u32 %s3, 4
      %s103 = int_to_ptr.hbm [resolvable:$true] %s102
      %105 = dma.vmem_to_hbm [thread:$0]  %s101, 16, %s103, [#allocation7]
    $region25: #{tpu_custom_call.1} parent=1 // pred_fallthru
      _
    // Predicated region
    $region26: #{tpu_custom_call.1} parent=1 // pred_check
      _
    $region27: #{tpu_custom_call.1} parent=1 // pred_check_branch
      %107 = sbr.rel (0) target = $region29
    $region28: #{tpu_custom_call.1} parent=1 // pred_region
      %109 = dma.done [#allocation4], 16
    $region29: #{tpu_custom_call.1} parent=1 // pred_fallthru
      _
    // Predicated region
    $region30: #{tpu_custom_call.1} parent=1 // pred_check
      _
    $region31: #{tpu_custom_call.1} parent=1 // pred_check_branch
      %111 = sbr.rel (0) target = $region33
    $region32: #{tpu_custom_call.1} parent=1 // pred_region
      %113 = dma.done [#allocation7], 16
    $region33: #{tpu_custom_call.1} parent=1 // pred_fallthru
      _
    %114 = vsyncpa [#allocation3], 1
    %115 = vsyncpa [#allocation4], 1
    %116 = vsyncpa [#allocation7], 1

</llo_original>
